<compile_context>
chip_gen: v7x
topology: tpu7x:2x2x1
jax: 0.10.0
libtpu: 0.0.40
codegen_flags: <defaults>
</compile_context>

<pallas_src>
from functools import partial

import jax
import jax.numpy as jnp
from jax.experimental import pallas as pl
from jax.experimental.pallas import tpu as pltpu


_VMEM_LIMIT_BYTES = 32 * 1024 * 1024   # safe cap on v5e/v6e (128 MiB phys) and v7x (64 MiB)
_FUSED_BLOCK_BYTES = 2 * 1024 * 1024   # x-block budget for the single fused kernel
_TILE_BLOCK_BYTES = 2 * 1024 * 1024    # x-tile budget for the spatially tiled path


def _largest_divisor_leq(n, cap):
    """Largest divisor of n that is <= cap (>= 1)."""
    cap = max(1, min(n, cap))
    for d in range(cap, 0, -1):
        if n % d == 0:
            return d
    return 1


# ----------------------------------------------------------------------------
# Fused single-pass kernel: pool + MLP + rescale for a (bn, C, HWp) slab.
#   x_ref  : (bn, C, HWp)  native dtype, spatial flattened (and zero-padded) on lanes
#   w1t    : (C, Cr)   squeeze conv weight, transposed   (Conv2d(C, C//r, 1))
#   b1     : (1, Cr)
#   w2t    : (Cr, C)   excite conv weight, transposed    (Conv2d(C//r, C, 1))
#   b2     : (1, C)
#   o_ref  : (bn, C, HWp)  same dtype as x
# ----------------------------------------------------------------------------
def _ca_fused_kernel(x_ref, w1t_ref, b1_ref, w2t_ref, b2_ref, o_ref, *, inv_hw):
    x = x_ref[...]
    xf = x.astype(jnp.float32)

    # AdaptiveAvgPool2d(1): padded lanes are zero, divide by the true H*W.
    pooled = jnp.sum(xf, axis=2) * inv_hw                               # (bn, C)

    # Squeeze/excite MLP as real batched matmuls on the MXU (f32 accumulation).
    h = jnp.dot(pooled, w1t_ref[...], preferred_element_type=jnp.float32) + b1_ref[...]
    h = jnp.maximum(h, 0.0)
    a = jnp.dot(h, w2t_ref[...], preferred_element_type=jnp.float32) + b2_ref[...]
    a = 1.0 / (1.0 + jnp.exp(-a))                                       # sigmoid (EUP exp)

    # Channel-wise rescale in f32 (v5e-safe), single cast on the store.
    o_ref[...] = (xf * a[:, :, None]).astype(o_ref.dtype)


# ----------------------------------------------------------------------------
# Tiled path, pass 1: pooled sum over spatial tiles + MLP -> per-(n, c) scale.
# Output block (1, C, 1) is resident across the tile axis (accumulator pattern).
# ----------------------------------------------------------------------------
def _ca_pool_mlp_kernel(x_ref, w1_ref, b1_ref, w2_ref, b2_ref, s_ref, *, inv_hw):
    t = pl.program_id(1)

    @pl.when(t == 0)
    def _():
        s_ref[...] = jnp.zeros_like(s_ref)

    s_ref[...] += jnp.sum(x_ref[...].astype(jnp.float32), axis=2, keepdims=True)

    @pl.when(t == pl.num_programs(1) - 1)
    def _():
        pooled = s_ref[0] * inv_hw                                      # (C, 1)
        h = jnp.dot(w1_ref[...], pooled, preferred_element_type=jnp.float32) + b1_ref[...]
        h = jnp.maximum(h, 0.0)                                         # (Cr, 1)
        a = jnp.dot(w2_ref[...], h, preferred_element_type=jnp.float32) + b2_ref[...]
        s_ref[0] = 1.0 / (1.0 + jnp.exp(-a))                            # (C, 1) sigmoid


# ----------------------------------------------------------------------------
# Tiled path, pass 2: channel-wise rescale, fully parallel over (batch, HW tiles).
# ----------------------------------------------------------------------------
def _ca_rescale_kernel(x_ref, s_ref, o_ref):
    o_ref[...] = (x_ref[...].astype(jnp.float32) * s_ref[...]).astype(o_ref.dtype)


# ----------------------------------------------------------------------------
# Wrapper
# ----------------------------------------------------------------------------
@partial(jax.jit, static_argnums=(5,))
def _ca_pallas_jit(x, w1, b1, w2, b2, max_fused_block_bytes):
    N, C, H, W = x.shape
    HW = H * W
    Cr = w1.shape[0]
    dt = x.dtype
    itemsize = dt.itemsize

    # Lane-dense spatial axis: pad the flattened H*W up to a multiple of 128 so all
    # loads / stores are full-width.  The mean uses the true H*W (inv_hw) and the
    # padded lanes are zero, so numerics are unchanged.
    HWp = ((HW + 127) // 128) * 128
    x2 = x.reshape(N, C, HW)
    padded = HWp != HW
    if padded:
        x2 = jnp.pad(x2, ((0, 0), (0, 0), (0, HWp - HW)))

    inv_hw = 1.0 / float(HW)
    w1f = w1.astype(jnp.float32)
    b1f = b1.astype(jnp.float32)
    w2f = w2.astype(jnp.float32)
    b2f = b2.astype(jnp.float32)

    # In-place alias only when x2 is a fresh intermediate (padded copy); aliasing a
    # live jit parameter would force XLA to insert a defensive copy (extra HBM pass).
    io_alias = {0: 0} if padded else {}

    slab_bytes = C * HWp * itemsize   # one batch element's activation slab

    if slab_bytes <= max_fused_block_bytes:
        # ---------------- fused single-kernel path (small / moderate H*W) ----------
        bn = _largest_divisor_leq(N, max(1, max_fused_block_bytes // slab_bytes))
        out = pl.pallas_call(
            partial(_ca_fused_kernel, inv_hw=inv_hw),
            out_shape=jax.ShapeDtypeStruct((N, C, HWp), dt),
            grid=(N // bn,),
            in_specs=[
                pl.BlockSpec((bn, C, HWp), lambda n: (n, 0, 0)),
                pl.BlockSpec((C, Cr), lambda n: (0, 0)),
                pl.BlockSpec((1, Cr), lambda n: (0, 0)),
                pl.BlockSpec((Cr, C), lambda n: (0, 0)),
                pl.BlockSpec((1, C), lambda n: (0, 0)),
            ],
            out_specs=pl.BlockSpec((bn, C, HWp), lambda n: (n, 0, 0)),
            input_output_aliases=io_alias,
            compiler_params=pltpu.CompilerParams(
                dimension_semantics=("parallel",),
                vmem_limit_bytes=_VMEM_LIMIT_BYTES),
        )(x2, w1f.T, b1f.reshape(1, Cr), w2f.T, b2f.reshape(1, C))
    else:
        # ---------------- spatially tiled two-kernel path (large H*W) --------------
        d_cap = max(1, _TILE_BLOCK_BYTES // (C * 128 * itemsize))
        d = _largest_divisor_leq(HWp // 128, d_cap)
        T = 128 * d
        n_t = HWp // T

        # Pass 1: pooled sum (accumulated in the resident output block) + MLP.
        scales = pl.pallas_call(
            partial(_ca_pool_mlp_kernel, inv_hw=inv_hw),
            out_shape=jax.ShapeDtypeStruct((N, C, 1), jnp.float32),
            grid=(N, n_t),
            in_specs=[
                pl.BlockSpec((1, C, T), lambda n, t: (n, 0, t)),
                pl.BlockSpec((Cr, C), lambda n, t: (0, 0)),
                pl.BlockSpec((Cr, 1), lambda n, t: (0, 0)),
                pl.BlockSpec((C, Cr), lambda n, t: (0, 0)),
                pl.BlockSpec((C, 1), lambda n, t: (0, 0)),
            ],
            out_specs=pl.BlockSpec((1, C, 1), lambda n, t: (n, 0, 0)),
            compiler_params=pltpu.CompilerParams(
                dimension_semantics=("parallel", "arbitrary"),
                vmem_limit_bytes=_VMEM_LIMIT_BYTES),
        )(x2, w1f, b1f.reshape(Cr, 1), w2f, b2f.reshape(C, 1))

        # Pass 2: rescale, both grid axes parallel (keeps both v7x cores busy at N=1).
        out = pl.pallas_call(
            _ca_rescale_kernel,
            out_shape=jax.ShapeDtypeStruct((N, C, HWp), dt),
            grid=(N, n_t),
            in_specs=[
                pl.BlockSpec((1, C, T), lambda n, t: (n, 0, t)),
                pl.BlockSpec((1, C, 1), lambda n, t: (n, 0, 0)),
            ],
            out_specs=pl.BlockSpec((1, C, T), lambda n, t: (n, 0, t)),
            input_output_aliases=io_alias,
            compiler_params=pltpu.CompilerParams(
                dimension_semantics=("parallel", "parallel"),
                vmem_limit_bytes=_VMEM_LIMIT_BYTES),
        )(x2, scales)

    if padded:
        out = out[:, :, :HW]
    return out.reshape(N, C, H, W)


def ca_pallas(x, w1, b1, w2, b2, max_fused_block_bytes=_FUSED_BLOCK_BYTES):
    """x: (N, C, H, W); w1: (Cr, C); b1: (Cr,); w2: (C, Cr); b2: (C,)."""
    return _ca_pallas_jit(x, w1, b1, w2, b2, max_fused_block_bytes)


# ----------------------------------------------------------------------------
# Pure-JAX reference of CA.forward (correctness check)
# ----------------------------------------------------------------------------
def ca_reference(x, w1, b1, w2, b2):
    xf = x.astype(jnp.float32)
    pooled = jnp.mean(xf, axis=(2, 3))                                   # (N, C)
    h = jnp.maximum(pooled @ w1.T + b1[None, :], 0.0)
    a = 1.0 / (1.0 + jnp.exp(-(h @ w2.T + b2[None, :])))
    return (xf * a[:, :, None, None]).astype(x.dtype)


# ----------------------------------------------------------------------------
if __name__ == "__main__":
    # CA(channel=64, reduction=16): channel must be >= reduction.
    N, C, H, W = 2, 64, 16, 16
    REDUCTION = 16
    CR = C // REDUCTION

    key = jax.random.PRNGKey(0)
    ks = jax.random.split(key, 5)

    x = jax.random.normal(ks[0], (N, C, H, W), dtype=jnp.float32)
    # Conv2d(C, C//r, 1) weight (Cr, C, 1, 1) flattened to (Cr, C), etc.
    w1 = 0.2 * jax.random.normal(ks[1], (CR, C), dtype=jnp.float32)
    b1 = 0.1 * jax.random.normal(ks[2], (CR,), dtype=jnp.float32)
    w2 = 0.2 * jax.random.normal(ks[3], (C, CR), dtype=jnp.float32)
    b2 = 0.1 * jax.random.normal(ks[4], (C,), dtype=jnp.float32)

    y_ref = ca_reference(x, w1, b1, w2, b2)

    # 1) fused single-kernel path (f32, lane-aligned H*W)
    y = jax.block_until_ready(ca_pallas(x, w1, b1, w2, b2))
    assert y.shape == (N, C, H, W) and y.dtype == x.dtype
    assert bool(jnp.all(jnp.isfinite(y)))
    assert bool(jnp.allclose(y, y_ref, rtol=1e-5, atol=1e-5)), (
        float(jnp.max(jnp.abs(y - y_ref))))

    # 2) spatially tiled two-kernel path (forced, same numerics)
    y_t = jax.block_until_ready(ca_pallas(x, w1, b1, w2, b2, max_fused_block_bytes=0))
    assert bool(jnp.allclose(y_t, y_ref, rtol=1e-5, atol=1e-5)), (
        float(jnp.max(jnp.abs(y_t - y_ref))))

    # 3) non-128-aligned spatial size (lane padding + true-H*W mean)
    x15 = jax.random.normal(ks[0], (1, C, 15, 15), dtype=jnp.float32)
    y15 = jax.block_until_ready(ca_pallas(x15, w1, b1, w2, b2))
    y15_ref = ca_reference(x15, w1, b1, w2, b2)
    assert y15.shape == x15.shape
    assert bool(jnp.allclose(y15, y15_ref, rtol=1e-5, atol=1e-5)), (
        float(jnp.max(jnp.abs(y15 - y15_ref))))

    # 4) native bf16 activations: no wrapper-side upcast, output dtype matches input
    xb = x.astype(jnp.bfloat16)
    yb = jax.block_until_ready(ca_pallas(xb, w1, b1, w2, b2))
    assert yb.dtype == jnp.bfloat16
    yb_ref = ca_reference(xb, w1, b1, w2, b2)
    assert bool(jnp.allclose(yb.astype(jnp.float32), yb_ref.astype(jnp.float32),
                             rtol=2e-2, atol=2e-2))

    print("KERNEL_OK")
</pallas_src>

<mosaic_0001>
module attributes {stable_mosaic.version = 11 : i64} {
  func.func @_ca_fused_kernel(%arg0: i32, %arg1: memref<2x64x256xf32, #tpu.memory_space<vmem>>, %arg2: memref<64x4xf32, #tpu.memory_space<vmem>>, %arg3: memref<1x4xf32, #tpu.memory_space<vmem>>, %arg4: memref<4x64xf32, #tpu.memory_space<vmem>>, %arg5: memref<1x64xf32, #tpu.memory_space<vmem>>, %arg6: memref<2x64x256xf32, #tpu.memory_space<vmem>>) attributes {dimension_semantics = [#tpu.dimension_semantics<parallel>], iteration_bounds = array<i64: 1>, scalar_prefetch = 0 : i64, scratch_operands = 0 : i64, tpu.core_type = #tpu.core_type<tc>, window_params = [{transform_indices = @transform_0, window_bounds = array<i64: 2, 64, 256>}, {pipeline_mode = #tpu.pipeline_mode<synchronous>, transform_indices = @transform_1, window_bounds = array<i64: 64, 4>}, {pipeline_mode = #tpu.pipeline_mode<synchronous>, transform_indices = @transform_2, window_bounds = array<i64: 1, 4>}, {pipeline_mode = #tpu.pipeline_mode<synchronous>, transform_indices = @transform_3, window_bounds = array<i64: 4, 64>}, {pipeline_mode = #tpu.pipeline_mode<synchronous>, transform_indices = @transform_4, window_bounds = array<i64: 1, 64>}, {transform_indices = @transform_5, window_bounds = array<i64: 2, 64, 256>}]} {
    %c0 = arith.constant 0 : index
    %c0_0 = arith.constant 0 : index
    %c0_1 = arith.constant 0 : index
    %0 = vector.load %arg1[%c0, %c0_0, %c0_1] : memref<2x64x256xf32, #tpu.memory_space<vmem>>, vector<2x64x256xf32>
    %cst = arith.constant dense<0.000000e+00> : vector<2x64xf32>
    %1 = vector.multi_reduction <add>, %0, %cst [2] : vector<2x64x256xf32> to vector<2x64xf32>
    %cst_2 = arith.constant 3.906250e-03 : f32
    %2 = vector.broadcast %cst_2 : f32 to vector<2x64xf32>
    %3 = arith.mulf %1, %2 : vector<2x64xf32>
    %c0_3 = arith.constant 0 : index
    %c0_4 = arith.constant 0 : index
    %4 = vector.load %arg2[%c0_3, %c0_4] : memref<64x4xf32, #tpu.memory_space<vmem>>, vector<64x4xf32>
    %cst_5 = arith.constant dense<0.000000e+00> : vector<2x4xf32>
    %5 = tpu.matmul %3, %4, %cst_5 {dimension_numbers = #tpu.dot_dimension_numbers<[1], [0], [0], [1], [0, 0, 1, 1], [], []>} : vector<2x64xf32>, vector<64x4xf32>, vector<2x4xf32> -> vector<2x4xf32>
    %c0_6 = arith.constant 0 : index
    %c0_7 = arith.constant 0 : index
    %6 = vector.load %arg3[%c0_6, %c0_7] : memref<1x4xf32, #tpu.memory_space<vmem>>, vector<1x4xf32>
    %7 = vector.broadcast %6 : vector<1x4xf32> to vector<2x4xf32>
    %8 = arith.addf %5, %7 : vector<2x4xf32>
    %cst_8 = arith.constant 0.000000e+00 : f32
    %9 = vector.broadcast %cst_8 : f32 to vector<2x4xf32>
    %10 = arith.maximumf %8, %9 : vector<2x4xf32>
    %c0_9 = arith.constant 0 : index
    %c0_10 = arith.constant 0 : index
    %11 = vector.load %arg4[%c0_9, %c0_10] : memref<4x64xf32, #tpu.memory_space<vmem>>, vector<4x64xf32>
    %cst_11 = arith.constant dense<0.000000e+00> : vector<2x64xf32>
    %12 = tpu.matmul %10, %11, %cst_11 {dimension_numbers = #tpu.dot_dimension_numbers<[1], [0], [0], [1], [0, 0, 1, 1], [], []>} : vector<2x4xf32>, vector<4x64xf32>, vector<2x64xf32> -> vector<2x64xf32>
    %c0_12 = arith.constant 0 : index
    %c0_13 = arith.constant 0 : index
    %13 = vector.load %arg5[%c0_12, %c0_13] : memref<1x64xf32, #tpu.memory_space<vmem>>, vector<1x64xf32>
    %14 = vector.broadcast %13 : vector<1x64xf32> to vector<2x64xf32>
    %15 = arith.addf %12, %14 : vector<2x64xf32>
    %cst_14 = arith.constant 0.000000e+00 : f32
    %16 = vector.broadcast %cst_14 : f32 to vector<2x64xf32>
    %17 = arith.subf %16, %15 : vector<2x64xf32>
    %18 = math.exp %17 : vector<2x64xf32>
    %cst_15 = arith.constant 1.000000e+00 : f32
    %19 = vector.broadcast %cst_15 : f32 to vector<2x64xf32>
    %20 = arith.addf %19, %18 : vector<2x64xf32>
    %cst_16 = arith.constant 1.000000e+00 : f32
    %21 = vector.broadcast %cst_16 : f32 to vector<2x64xf32>
    %22 = arith.divf %21, %20 : vector<2x64xf32>
    %23 = vector.shape_cast %22 : vector<2x64xf32> to vector<2x64x1xf32>
    %24 = vector.broadcast %23 : vector<2x64x1xf32> to vector<2x64x256xf32>
    %25 = arith.mulf %0, %24 : vector<2x64x256xf32>
    %c0_17 = arith.constant 0 : index
    %c0_18 = arith.constant 0 : index
    %c0_19 = arith.constant 0 : index
    %26 = vector.load %arg6[%c0_17, %c0_18, %c0_19] : memref<2x64x256xf32, #tpu.memory_space<vmem>>, vector<2x64x256xf32>
    tpu.vector_store %arg6[%c0_17, %c0_18, %c0_19], %25 {strides = array<i32>} : memref<2x64x256xf32, #tpu.memory_space<vmem>>, vector<2x64x256xf32>,
    return
  }
  func.func @transform_0(%arg0: i32) -> (i32, i32, i32) {
    %c0_i32 = arith.constant 0 : i32
    %c0_i32_0 = arith.constant 0 : i32
    %c0_i32_1 = arith.constant 0 : i32
    return %arg0, %c0_i32, %c0_i32_0 : i32, i32, i32
  }
  func.func @transform_1(%arg0: i32) -> (i32, i32) {
    %c0_i32 = arith.constant 0 : i32
    %c0_i32_0 = arith.constant 0 : i32
    %c0_i32_1 = arith.constant 0 : i32
    return %c0_i32, %c0_i32_0 : i32, i32
  }
  func.func @transform_2(%arg0: i32) -> (i32, i32) {
    %c0_i32 = arith.constant 0 : i32
    %c0_i32_0 = arith.constant 0 : i32
    %c0_i32_1 = arith.constant 0 : i32
    return %c0_i32, %c0_i32_0 : i32, i32
  }
  func.func @transform_3(%arg0: i32) -> (i32, i32) {
    %c0_i32 = arith.constant 0 : i32
    %c0_i32_0 = arith.constant 0 : i32
    %c0_i32_1 = arith.constant 0 : i32
    return %c0_i32, %c0_i32_0 : i32, i32
  }
  func.func @transform_4(%arg0: i32) -> (i32, i32) {
    %c0_i32 = arith.constant 0 : i32
    %c0_i32_0 = arith.constant 0 : i32
    %c0_i32_1 = arith.constant 0 : i32
    return %c0_i32, %c0_i32_0 : i32, i32
  }
  func.func @transform_5(%arg0: i32) -> (i32, i32, i32) {
    %c0_i32 = arith.constant 0 : i32
    %c0_i32_0 = arith.constant 0 : i32
    %c0_i32_1 = arith.constant 0 : i32
    return %arg0, %c0_i32, %c0_i32_0 : i32, i32, i32
  }
}

</mosaic_0001>

<llo_original>
// kernel: _ca_pallas_jit.1
$region0: #{_ca_pallas_jit.1}
  #allocation0 [shape = 'u32[]', space=smem, size = 0x4, offset = 0x4, fixed_abs, tag = 'smem constant byte address 0x4 - core index']
  #allocation1 [shape = 'u32[144,128]{1,0:T(1,128)}', space=vmem, size = 0x12000, scoped, tag = 'internal scratch']
  %s0 = inlined_call_operand.vmem [shape: f32[2,64,256], index: 0, kind: input, shape index: {}]
  %s1 = inlined_call_operand.vmem [shape: f32[64,4], index: 1, kind: input, shape index: {}]
  %s2 = inlined_call_operand.vmem [shape: f32[1,4], index: 2, kind: input, shape index: {}]
  %s3 = inlined_call_operand.vmem [shape: f32[4,64], index: 3, kind: input, shape index: {}]
  %s4 = inlined_call_operand.vmem [shape: f32[1,64], index: 4, kind: input, shape index: {}]
  %s5 = inlined_call_operand.vmem [shape: f32[2,64,256], index: 5, kind: output, shape index: {}]
  %s6 = sld [smem:[#allocation0]]
  $region30: #{_ca_pallas_jit.1} parent=0
    _
  %s8 = ssub.s32 1, %s6
  %s9 = scalar_select 0, %s8, %s6
  // Predicated region
  $region2: #{_ca_pallas_jit.1} parent=0 // pred_check
    _
  $region3: #{_ca_pallas_jit.1} parent=0 // pred_check_branch
    %11 = sbr.rel (0) target = $region5
  $region4: #{_ca_pallas_jit.1} parent=0 // pred_region
    _
  $region5: #{_ca_pallas_jit.1} parent=0 // pred_fallthru
    _
  // Predicated region
  $region6: #{_ca_pallas_jit.1} parent=0 // pred_check
    _
  $region7: #{_ca_pallas_jit.1} parent=0 // pred_check_branch
    %13 = sbr.rel (0) target = $region9
  $region8: #{_ca_pallas_jit.1} parent=0 // pred_region
    _
  $region9: #{_ca_pallas_jit.1} parent=0 // pred_fallthru
    _
  // Predicated region
  $region10: #{_ca_pallas_jit.1} parent=0 // pred_check
    _
  $region11: #{_ca_pallas_jit.1} parent=0 // pred_check_branch
    %15 = sbr.rel (0) target = $region13
  $region12: #{_ca_pallas_jit.1} parent=0 // pred_region
    _
  $region13: #{_ca_pallas_jit.1} parent=0 // pred_fallthru
    _
  // Predicated region
  $region14: #{_ca_pallas_jit.1} parent=0 // pred_check
    _
  $region15: #{_ca_pallas_jit.1} parent=0 // pred_check_branch
    %17 = sbr.rel (0) target = $region17
  $region16: #{_ca_pallas_jit.1} parent=0 // pred_region
    _
  $region17: #{_ca_pallas_jit.1} parent=0 // pred_fallthru
    _
  // Predicated region
  $region18: #{_ca_pallas_jit.1} parent=0 // pred_check
    _
  $region19: #{_ca_pallas_jit.1} parent=0 // pred_check_branch
    %19 = sbr.rel (0) target = $region21
  $region20: #{_ca_pallas_jit.1} parent=0 // pred_region
    _
  $region21: #{_ca_pallas_jit.1} parent=0 // pred_fallthru
    _
  %v20 = vld [vmem:[%s0] sm:$0xff]
  %v21 = vld [vmem:[%s0 + $0x8] sm:$0xff]
  %v22 = vld [vmem:[%s0 + $0x10] sm:$0xff]
  %v23 = vld [vmem:[%s0 + $0x18] sm:$0xff]
  %v24 = vld [vmem:[%s0 + $0x20] sm:$0xff]
  %v25 = vld [vmem:[%s0 + $0x28] sm:$0xff]
  %v26 = vld [vmem:[%s0 + $0x30] sm:$0xff]
  %v27 = vld [vmem:[%s0 + $0x38] sm:$0xff]
  %v28 = vld [vmem:[%s0 + $0x40] sm:$0xff]
  %v29 = vld [vmem:[%s0 + $0x48] sm:$0xff]
  %v30 = vld [vmem:[%s0 + $0x50] sm:$0xff]
  %v31 = vld [vmem:[%s0 + $0x58] sm:$0xff]
  %v32 = vld [vmem:[%s0 + $0x60] sm:$0xff]
  %v33 = vld [vmem:[%s0 + $0x68] sm:$0xff]
  %v34 = vld [vmem:[%s0 + $0x70] sm:$0xff]
  %v35 = vld [vmem:[%s0 + $0x78] sm:$0xff]
  %v36 = vld [vmem:[%s0 + $0x80] sm:$0xff]
  %v37 = vld [vmem:[%s0 + $0x88] sm:$0xff]
  %v38 = vld [vmem:[%s0 + $0x90] sm:$0xff]
  %v39 = vld [vmem:[%s0 + $0x98] sm:$0xff]
  %v40 = vld [vmem:[%s0 + $0xa0] sm:$0xff]
  %v41 = vld [vmem:[%s0 + $0xa8] sm:$0xff]
  %v42 = vld [vmem:[%s0 + $0xb0] sm:$0xff]
  %v43 = vld [vmem:[%s0 + $0xb8] sm:$0xff]
  %v44 = vld [vmem:[%s0 + $0xc0] sm:$0xff]
  %v45 = vld [vmem:[%s0 + $0xc8] sm:$0xff]
  %v46 = vld [vmem:[%s0 + $0xd0] sm:$0xff]
  %v47 = vld [vmem:[%s0 + $0xd8] sm:$0xff]
  %v48 = vld [vmem:[%s0 + $0xe0] sm:$0xff]
  %v49 = vld [vmem:[%s0 + $0xe8] sm:$0xff]
  %v50 = vld [vmem:[%s0 + $0xf0] sm:$0xff]
  %v51 = vld [vmem:[%s0 + $0xf8] sm:$0xff]
  %v52 = vadd.f32 %v20, %v21
  %53 = vadd.xlane.f32.xlu0 %v52
  %v54 = vpop.xlane.xlu0 %53
  %v55 = vadd.f32 %v22, %v23
  %56 = vadd.xlane.f32.xlu0 %v55
  %v57 = vpop.xlane.xlu0 %56
  %v58 = vadd.f32 %v24, %v25
  %59 = vadd.xlane.f32.xlu0 %v58
  %v60 = vpop.xlane.xlu0 %59
  %v61 = vadd.f32 %v26, %v27
  %62 = vadd.xlane.f32.xlu0 %v61
  %v63 = vpop.xlane.xlu0 %62
  %v64 = vadd.f32 %v28, %v29
  %65 = vadd.xlane.f32.xlu0 %v64
  %v66 = vpop.xlane.xlu0 %65
  %v67 = vadd.f32 %v30, %v31
  %68 = vadd.xlane.f32.xlu0 %v67
  %v69 = vpop.xlane.xlu0 %68
  %v70 = vadd.f32 %v32, %v33
  %71 = vadd.xlane.f32.xlu0 %v70
  %v72 = vpop.xlane.xlu0 %71
  %v73 = vadd.f32 %v34, %v35
  %74 = vadd.xlane.f32.xlu0 %v73
  %v75 = vpop.xlane.xlu0 %74
  %v76 = vadd.f32 %v36, %v37
  %77 = vadd.xlane.f32.xlu0 %v76
  %v78 = vpop.xlane.xlu0 %77
  %v79 = vadd.f32 %v38, %v39
  %80 = vadd.xlane.f32.xlu0 %v79
  %v81 = vpop.xlane.xlu0 %80
  %v82 = vadd.f32 %v40, %v41
  %83 = vadd.xlane.f32.xlu0 %v82
  %v84 = vpop.xlane.xlu0 %83
  %v85 = vadd.f32 %v42, %v43
  %86 = vadd.xlane.f32.xlu0 %v85
  %v87 = vpop.xlane.xlu0 %86
  %v88 = vadd.f32 %v44, %v45
  %89 = vadd.xlane.f32.xlu0 %v88
  %v90 = vpop.xlane.xlu0 %89
  %v91 = vadd.f32 %v46, %v47
  %92 = vadd.xlane.f32.xlu0 %v91
  %v93 = vpop.xlane.xlu0 %92
  %v94 = vadd.f32 %v48, %v49
  %95 = vadd.xlane.f32.xlu0 %v94
  %v96 = vpop.xlane.xlu0 %95
  %v97 = vadd.f32 %v50, %v51
  %98 = vadd.xlane.f32.xlu0 %v97
  %v99 = vpop.xlane.xlu0 %98
  %v100 = vmul.f32 %v54, 0.00390625
  %v101 = vmul.f32 %v57, 0.00390625
  %v102 = vmul.f32 %v60, 0.00390625
  %v103 = vmul.f32 %v63, 0.00390625
  %v104 = vmul.f32 %v66, 0.00390625
  %v105 = vmul.f32 %v69, 0.00390625
  %v106 = vmul.f32 %v72, 0.00390625
  %v107 = vmul.f32 %v75, 0.00390625
  %v108 = vmul.f32 %v78, 0.00390625
  %v109 = vmul.f32 %v81, 0.00390625
  %v110 = vmul.f32 %v84, 0.00390625
  %v111 = vmul.f32 %v87, 0.00390625
  %v112 = vmul.f32 %v90, 0.00390625
  %v113 = vmul.f32 %v93, 0.00390625
  %v114 = vmul.f32 %v96, 0.00390625
  %v115 = vmul.f32 %v99, 0.00390625
  %v116 = vld [vmem:[%s1] sm:$0xff]
  %v117 = vld [vmem:[%s1 + $0x8] sm:$0xff]
  %v118 = vld [vmem:[%s1 + $0x10] sm:$0xff]
  %v119 = vld [vmem:[%s1 + $0x18] sm:$0xff]
  %v120 = vld [vmem:[%s1 + $0x20] sm:$0xff]
  %v121 = vld [vmem:[%s1 + $0x28] sm:$0xff]
  %v122 = vld [vmem:[%s1 + $0x30] sm:$0xff]
  %v123 = vld [vmem:[%s1 + $0x38] sm:$0xff]
  %v124 = vld [vmem:[%s2] sm:$0x1]
  %v126 = vlaneseq
  %v127 = vshrl.u32 %v126, 7
  %v128 = vsub.s32 0, %v127
  %v129 = vrot.slane %v124, %v128
  %v147 = vlaneseq
  %v148 = vand.u32 %v147, 127
  %v149 = vlaneseq
  %v150 = vshrl.u32 %v149, 7
  %v151 = vsub.s32 %v148, %v150
  %v152 = vrot.slane %v100, %v151
  %v153 = vadd.s32 %v148, 4294967288
  %v154 = vlaneseq
  %v155 = vshrl.u32 %v154, 7
  %v156 = vsub.s32 %v153, %v155
  %v157 = vrot.slane %v101, %v156
  %vm158 = vcmask 130112
  %v159 = vsel %vm158, %v157, %v152
  %v160 = vadd.s32 %v148, 4294967280
  %v161 = vlaneseq
  %v162 = vshrl.u32 %v161, 7
  %v163 = vsub.s32 %v160, %v162
  %v164 = vrot.slane %v102, %v163
  %vm165 = vcmask 195712
  %v166 = vsel %vm165, %v164, %v159
  %v167 = vadd.s32 %v148, 4294967272
  %v168 = vlaneseq
  %v169 = vshrl.u32 %v168, 7
  %v170 = vsub.s32 %v167, %v169
  %v171 = vrot.slane %v103, %v170
  %vm172 = vcmask 261312
  %v173 = vsel %vm172, %v171, %v166
  %v174 = vadd.s32 %v148, 4294967264
  %v175 = vlaneseq
  %v176 = vshrl.u32 %v175, 7
  %v177 = vsub.s32 %v174, %v176
  %v178 = vrot.slane %v104, %v177
  %vm179 = vcmask 326912
  %v180 = vsel %vm179, %v178, %v173
  %v181 = vadd.s32 %v148, 4294967256
  %v182 = vlaneseq
  %v183 = vshrl.u32 %v182, 7
  %v184 = vsub.s32 %v181, %v183
  %v185 = vrot.slane %v105, %v184
  %vm186 = vcmask 392512
  %v187 = vsel %vm186, %v185, %v180
  %v188 = vadd.s32 %v148, 4294967248
  %v189 = vlaneseq
  %v190 = vshrl.u32 %v189, 7
  %v191 = vsub.s32 %v188, %v190
  %v192 = vrot.slane %v106, %v191
  %vm193 = vcmask 458112
  %v194 = vsel %vm193, %v192, %v187
  %v195 = vadd.s32 %v148, 4294967240
  %v196 = vlaneseq
  %v197 = vshrl.u32 %v196, 7
  %v198 = vsub.s32 %v195, %v197
  %v199 = vrot.slane %v107, %v198
  %vm200 = vcmask 523712
  %v201 = vsel %vm200, %v199, %v194
  %v202 = vlaneseq
  %v203 = vshrl.u32 %v202, 7
  %v204 = vsub.s32 %v148, %v203
  %v205 = vrot.slane %v108, %v204
  %v206 = vlaneseq
  %v207 = vshrl.u32 %v206, 7
  %v208 = vsub.s32 %v153, %v207
  %v209 = vrot.slane %v109, %v208
  %v210 = vsel %vm158, %v209, %v205
  %v211 = vlaneseq
  %v212 = vshrl.u32 %v211, 7
  %v213 = vsub.s32 %v160, %v212
  %v214 = vrot.slane %v110, %v213
  %v215 = vsel %vm165, %v214, %v210
  %v216 = vlaneseq
  %v217 = vshrl.u32 %v216, 7
  %v218 = vsub.s32 %v167, %v217
  %v219 = vrot.slane %v111, %v218
  %v220 = vsel %vm172, %v219, %v215
  %v221 = vlaneseq
  %v222 = vshrl.u32 %v221, 7
  %v223 = vsub.s32 %v174, %v222
  %v224 = vrot.slane %v112, %v223
  %v225 = vsel %vm179, %v224, %v220
  %v226 = vlaneseq
  %v227 = vshrl.u32 %v226, 7
  %v228 = vsub.s32 %v181, %v227
  %v229 = vrot.slane %v113, %v228
  %v230 = vsel %vm186, %v229, %v225
  %v231 = vlaneseq
  %v232 = vshrl.u32 %v231, 7
  %v233 = vsub.s32 %v188, %v232
  %v234 = vrot.slane %v114, %v233
  %v235 = vsel %vm193, %v234, %v230
  %v236 = vlaneseq
  %v237 = vshrl.u32 %v236, 7
  %v238 = vsub.s32 %v195, %v237
  %v239 = vrot.slane %v115, %v238
  %v240 = vsel %vm200, %v239, %v235
  %vm241 = vcmask 1041409
  %v242 = vsel %vm241, %v240, %v201
  %vm243 = vcmask 523264
  %v244 = vsel %vm243, %v242, 0
  %246 = vmatprep.subr.mxu0 0.0
  %247 = vmatpush1.msra.mxu0 %v116
  %248 = vmatprep.subr.mxu0 0.0
  %249 = vmatpush1.msra.mxu0 %v117
  %250 = vmatprep.subr.mxu0 0.0
  %251 = vmatpush1.msra.mxu0 %v118
  %252 = vmatprep.subr.mxu0 0.0
  %253 = vmatpush1.msra.mxu0 %v119
  %254 = vmatprep.subr.mxu0 0.0
  %255 = vmatpush1.msra.mxu0 %v120
  %256 = vmatprep.subr.mxu0 0.0
  %257 = vmatpush1.msra.mxu0 %v121
  %258 = vmatprep.subr.mxu0 0.0
  %259 = vmatpush1.msra.mxu0 %v122
  %260 = vmatprep.subr.mxu0 0.0
  %261 = vmatpush1.msra.mxu0 %v123
  %262 = vmatprep.subr.mxu0 0.0
  %263 = vmatpush1.msra.mxu0 0.0
  %264 = vmatprep.subr.mxu0 0.0
  %265 = vmatpush1.msra.mxu0 0.0
  %266 = vmatprep.subr.mxu0 0.0
  %267 = vmatpush1.msra.mxu0 0.0
  %268 = vmatprep.subr.mxu0 0.0
  %269 = vmatpush1.msra.mxu0 0.0
  %270 = vmatprep.subr.mxu0 0.0
  %271 = vmatpush1.msra.mxu0 0.0
  %272 = vmatprep.subr.mxu0 0.0
  %273 = vmatpush1.msra.mxu0 0.0
  %274 = vmatprep.subr.mxu0 0.0
  %275 = vmatpush1.msra.mxu0 0.0
  %276 = vmatprep.subr.mxu0 0.0
  %277 = vmatpush1.msra.mxu0 0.0
  %278 = vmatprep.subr.mxu0 0.0
  %279 = vmatpush1.msra.mxu0 0.0
  %280 = vmatprep.subr.mxu0 0.0
  %281 = vmatpush1.msra.mxu0 0.0
  %282 = vmatprep.subr.mxu0 0.0
  %283 = vmatpush1.msra.mxu0 0.0
  %284 = vmatprep.subr.mxu0 0.0
  %285 = vmatpush1.msra.mxu0 0.0
  %286 = vmatprep.subr.mxu0 0.0
  %287 = vmatpush1.msra.mxu0 0.0
  %288 = vmatprep.subr.mxu0 0.0
  %289 = vmatpush1.msra.mxu0 0.0
  %290 = vmatprep.subr.mxu0 0.0
  %291 = vmatpush1.msra.mxu0 0.0
  %292 = vmatprep.subr.mxu0 0.0
  %293 = vmatpush1.msra.mxu0 0.0
  %294 = vmatprep.subr.mxu0 0.0
  %295 = vmatpush1.msra.mxu0 0.0
  %296 = vmatprep.subr.mxu0 0.0
  %297 = vmatpush1.msra.mxu0 0.0
  %298 = vmatprep.subr.mxu0 0.0
  %299 = vmatpush1.msra.mxu0 0.0
  %300 = vmatprep.subr.mxu0 0.0
  %301 = vmatpush1.msra.mxu0 0.0
  %302 = vmatprep.subr.mxu0 0.0
  %303 = vmatpush1.msra.mxu0 0.0
  %304 = vmatprep.subr.mxu0 0.0
  %305 = vmatpush1.msra.mxu0 0.0
  %306 = vmatprep.subr.mxu0 0.0
  %307 = vmatpush1.msra.mxu0 0.0
  %308 = vmatprep.subr.mxu0 0.0
  %309 = vmatpush1.msra.mxu0 0.0
  %310 = vmatprep.mubr.f32.mxu0 0.0
  %311 = vmatmul.mubr.f32.gmra.mrb[0].mxu0 %v244
  %v312 = vpop.f32.mrb[0].mxu0
  %v313 = vadd.f32 %v129, %v312
  %v314 = vpop.f32.mrb[0].mxu0
  %315 = vdwg.mxu0
  %v316 = vmax.f32 %v313, 0.0
  %v317 = vld [vmem:[%s3] sm:$0xf]
  %v318 = vld [vmem:[%s4] sm:$0x1]
  %v320 = vlaneseq
  %v321 = vshrl.u32 %v320, 7
  %v322 = vsub.s32 0, %v321
  %v323 = vrot.slane %v318, %v322
  %vm325 = vcmask 31744
  %v327 = vsel %vm325, %v316, 0
  %vm329 = vcmask 1043456
  %v331 = vsel %vm329, %v317, 0
  %333 = vmatprep.subr.mxu0 0.0
  %334 = vmatpush1.msra.mxu0 %v331
  %335 = vmatprep.subr.mxu0 0.0
  %336 = vmatpush1.msra.mxu0 0.0
  %337 = vmatprep.subr.mxu0 0.0
  %338 = vmatpush1.msra.mxu0 0.0
  %339 = vmatprep.subr.mxu0 0.0
  %340 = vmatpush1.msra.mxu0 0.0
  %341 = vmatprep.subr.mxu0 0.0
  %342 = vmatpush1.msra.mxu0 0.0
  %343 = vmatprep.subr.mxu0 0.0
  %344 = vmatpush1.msra.mxu0 0.0
  %345 = vmatprep.subr.mxu0 0.0
  %346 = vmatpush1.msra.mxu0 0.0
  %347 = vmatprep.subr.mxu0 0.0
  %348 = vmatpush1.msra.mxu0 0.0
  %349 = vmatprep.subr.mxu0 0.0
  %350 = vmatpush1.msra.mxu0 0.0
  %351 = vmatprep.subr.mxu0 0.0
  %352 = vmatpush1.msra.mxu0 0.0
  %353 = vmatprep.subr.mxu0 0.0
  %354 = vmatpush1.msra.mxu0 0.0
  %355 = vmatprep.subr.mxu0 0.0
  %356 = vmatpush1.msra.mxu0 0.0
  %357 = vmatprep.subr.mxu0 0.0
  %358 = vmatpush1.msra.mxu0 0.0
  %359 = vmatprep.subr.mxu0 0.0
  %360 = vmatpush1.msra.mxu0 0.0
  %361 = vmatprep.subr.mxu0 0.0
  %362 = vmatpush1.msra.mxu0 0.0
  %363 = vmatprep.subr.mxu0 0.0
  %364 = vmatpush1.msra.mxu0 0.0
  %365 = vmatprep.subr.mxu0 0.0
  %366 = vmatpush1.msra.mxu0 0.0
  %367 = vmatprep.subr.mxu0 0.0
  %368 = vmatpush1.msra.mxu0 0.0
  %369 = vmatprep.subr.mxu0 0.0
  %370 = vmatpush1.msra.mxu0 0.0
  %371 = vmatprep.subr.mxu0 0.0
  %372 = vmatpush1.msra.mxu0 0.0
  %373 = vmatprep.subr.mxu0 0.0
  %374 = vmatpush1.msra.mxu0 0.0
  %375 = vmatprep.subr.mxu0 0.0
  %376 = vmatpush1.msra.mxu0 0.0
  %377 = vmatprep.subr.mxu0 0.0
  %378 = vmatpush1.msra.mxu0 0.0
  %379 = vmatprep.subr.mxu0 0.0
  %380 = vmatpush1.msra.mxu0 0.0
  %381 = vmatprep.subr.mxu0 0.0
  %382 = vmatpush1.msra.mxu0 0.0
  %383 = vmatprep.subr.mxu0 0.0
  %384 = vmatpush1.msra.mxu0 0.0
  %385 = vmatprep.subr.mxu0 0.0
  %386 = vmatpush1.msra.mxu0 0.0
  %387 = vmatprep.subr.mxu0 0.0
  %388 = vmatpush1.msra.mxu0 0.0
  %389 = vmatprep.subr.mxu0 0.0
  %390 = vmatpush1.msra.mxu0 0.0
  %391 = vmatprep.subr.mxu0 0.0
  %392 = vmatpush1.msra.mxu0 0.0
  %393 = vmatprep.subr.mxu0 0.0
  %394 = vmatpush1.msra.mxu0 0.0
  %395 = vmatprep.subr.mxu0 0.0
  %396 = vmatpush1.msra.mxu0 0.0
  %397 = vmatprep.mubr.f32.mxu0 0.0
  %398 = vmatmul.mubr.f32.gmra.mrb[0].mxu0 %v327
  %v399 = vpop.f32.mrb[0].mxu0
  %v400 = vadd.f32 %v323, %v399
  %v401 = vpop.f32.mrb[0].mxu0
  %402 = vdwg.mxu0
  %v403 = vsub.f32 0.0, %v400
  %v404 = vmul.f32 %v403, 1.442695
  %v405 = vpow.pop %v404
  %v406 = vadd.f32 %v405, 1.0
  %v407 = vrcp.pop %v406
  %v408 = vmul.f32 1.0, %v407
  %v409 = vlaneseq
  %v410 = vshrl.u32 %v409, 7
  %v411 = vsub.s32 0, %v410
  %v412 = vrot.slane %v408, %v411
  %414 = vbcast.lane.b32.xlu0 %v412, 256
  %v415 = vpop.permute.xlu0 %414
  %s417 = sor.u32 256, 8
  %418 = vbcast.lane.b32.xlu0 %v412, %s417
  %v419 = vpop.permute.xlu0 %418
  %s421 = sor.u32 256, 16
  %422 = vbcast.lane.b32.xlu0 %v412, %s421
  %v423 = vpop.permute.xlu0 %422
  %s425 = sor.u32 256, 24
  %426 = vbcast.lane.b32.xlu0 %v412, %s425
  %v427 = vpop.permute.xlu0 %426
  %s429 = sor.u32 256, 32
  %430 = vbcast.lane.b32.xlu0 %v412, %s429
  %v431 = vpop.permute.xlu0 %430
  %s433 = sor.u32 256, 40
  %434 = vbcast.lane.b32.xlu0 %v412, %s433
  %v435 = vpop.permute.xlu0 %434
  %s437 = sor.u32 256, 48
  %438 = vbcast.lane.b32.xlu0 %v412, %s437
  %v439 = vpop.permute.xlu0 %438
  %s441 = sor.u32 256, 56
  %442 = vbcast.lane.b32.xlu0 %v412, %s441
  %v443 = vpop.permute.xlu0 %442
  %v444 = vlaneseq
  %v445 = vshrl.u32 %v444, 7
  %v446 = vsub.s32 1, %v445
  %v447 = vrot.slane %v408, %v446
  %449 = vbcast.lane.b32.xlu0 %v447, 256
  %v450 = vpop.permute.xlu0 %449
  %s452 = sor.u32 256, 8
  %453 = vbcast.lane.b32.xlu0 %v447, %s452
  %v454 = vpop.permute.xlu0 %453
  %s456 = sor.u32 256, 16
  %457 = vbcast.lane.b32.xlu0 %v447, %s456
  %v458 = vpop.permute.xlu0 %457
  %s460 = sor.u32 256, 24
  %461 = vbcast.lane.b32.xlu0 %v447, %s460
  %v462 = vpop.permute.xlu0 %461
  %s464 = sor.u32 256, 32
  %465 = vbcast.lane.b32.xlu0 %v447, %s464
  %v466 = vpop.permute.xlu0 %465
  %s468 = sor.u32 256, 40
  %469 = vbcast.lane.b32.xlu0 %v447, %s468
  %v470 = vpop.permute.xlu0 %469
  %s472 = sor.u32 256, 48
  %473 = vbcast.lane.b32.xlu0 %v447, %s472
  %v474 = vpop.permute.xlu0 %473
  %s476 = sor.u32 256, 56
  %477 = vbcast.lane.b32.xlu0 %v447, %s476
  %v478 = vpop.permute.xlu0 %477
  %v479 = vmul.f32 %v20, %v415
  %v480 = vmul.f32 %v21, %v415
  %v481 = vmul.f32 %v22, %v419
  %v482 = vmul.f32 %v23, %v419
  %v483 = vmul.f32 %v24, %v423
  %v484 = vmul.f32 %v25, %v423
  %v485 = vmul.f32 %v26, %v427
  %v486 = vmul.f32 %v27, %v427
  %v487 = vmul.f32 %v28, %v431
  %v488 = vmul.f32 %v29, %v431
  %v489 = vmul.f32 %v30, %v435
  %v490 = vmul.f32 %v31, %v435
  %v491 = vmul.f32 %v32, %v439
  %v492 = vmul.f32 %v33, %v439
  %v493 = vmul.f32 %v34, %v443
  %v494 = vmul.f32 %v35, %v443
  %v495 = vmul.f32 %v36, %v450
  %v496 = vmul.f32 %v37, %v450
  %v497 = vmul.f32 %v38, %v454
  %v498 = vmul.f32 %v39, %v454
  %v499 = vmul.f32 %v40, %v458
  %v500 = vmul.f32 %v41, %v458
  %v501 = vmul.f32 %v42, %v462
  %v502 = vmul.f32 %v43, %v462
  %v503 = vmul.f32 %v44, %v466
  %v504 = vmul.f32 %v45, %v466
  %v505 = vmul.f32 %v46, %v470
  %v506 = vmul.f32 %v47, %v470
  %v507 = vmul.f32 %v48, %v474
  %v508 = vmul.f32 %v49, %v474
  %v509 = vmul.f32 %v50, %v478
  %v510 = vmul.f32 %v51, %v478
  %511 = vst [vmem:[%s5] sm:$0xff] %v479
  %512 = vst [vmem:[%s5 + $0x8] sm:$0xff] %v480
  %513 = vst [vmem:[%s5 + $0x10] sm:$0xff] %v481
  %514 = vst [vmem:[%s5 + $0x18] sm:$0xff] %v482
  %515 = vst [vmem:[%s5 + $0x20] sm:$0xff] %v483
  %516 = vst [vmem:[%s5 + $0x28] sm:$0xff] %v484
  %517 = vst [vmem:[%s5 + $0x30] sm:$0xff] %v485
  %518 = vst [vmem:[%s5 + $0x38] sm:$0xff] %v486
  %519 = vst [vmem:[%s5 + $0x40] sm:$0xff] %v487
  %520 = vst [vmem:[%s5 + $0x48] sm:$0xff] %v488
  %521 = vst [vmem:[%s5 + $0x50] sm:$0xff] %v489
  %522 = vst [vmem:[%s5 + $0x58] sm:$0xff] %v490
  %523 = vst [vmem:[%s5 + $0x60] sm:$0xff] %v491
  %524 = vst [vmem:[%s5 + $0x68] sm:$0xff] %v492
  %525 = vst [vmem:[%s5 + $0x70] sm:$0xff] %v493
  %526 = vst [vmem:[%s5 + $0x78] sm:$0xff] %v494
  %527 = vst [vmem:[%s5 + $0x80] sm:$0xff] %v495
  %528 = vst [vmem:[%s5 + $0x88] sm:$0xff] %v496
  %529 = vst [vmem:[%s5 + $0x90] sm:$0xff] %v497
  %530 = vst [vmem:[%s5 + $0x98] sm:$0xff] %v498
  %531 = vst [vmem:[%s5 + $0xa0] sm:$0xff] %v499
  %532 = vst [vmem:[%s5 + $0xa8] sm:$0xff] %v500
  %533 = vst [vmem:[%s5 + $0xb0] sm:$0xff] %v501
  %534 = vst [vmem:[%s5 + $0xb8] sm:$0xff] %v502
  %535 = vst [vmem:[%s5 + $0xc0] sm:$0xff] %v503
  %536 = vst [vmem:[%s5 + $0xc8] sm:$0xff] %v504
  %537 = vst [vmem:[%s5 + $0xd0] sm:$0xff] %v505
  %538 = vst [vmem:[%s5 + $0xd8] sm:$0xff] %v506
  %539 = vst [vmem:[%s5 + $0xe0] sm:$0xff] %v507
  %540 = vst [vmem:[%s5 + $0xe8] sm:$0xff] %v508
  %541 = vst [vmem:[%s5 + $0xf0] sm:$0xff] %v509
  %542 = vst [vmem:[%s5 + $0xf8] sm:$0xff] %v510
  // Predicated region
  $region22: #{_ca_pallas_jit.1} parent=0 // pred_check
    _
  $region23: #{_ca_pallas_jit.1} parent=0 // pred_check_branch
    %544 = sbr.rel (0) target = $region25
  $region24: #{_ca_pallas_jit.1} parent=0 // pred_region
    _
  $region25: #{_ca_pallas_jit.1} parent=0 // pred_fallthru
    _
  // Predicated region
  $region26: #{_ca_pallas_jit.1} parent=0 // pred_check
    _
  $region27: #{_ca_pallas_jit.1} parent=0 // pred_check_branch
    %546 = sbr.rel (0) target = $region29
  $region28: #{_ca_pallas_jit.1} parent=0 // pred_region
    _
  $region29: #{_ca_pallas_jit.1} parent=0 // pred_fallthru
    _

</llo_original>
